<compile_context>
chip_gen: v6e
topology: v6e:2x2x1
jax: 0.10.0
libtpu: 0.0.40
codegen_flags: <defaults>
</compile_context>

<pallas_src>
import functools

import jax
import jax.numpy as jnp
from jax.experimental import pallas as pl
from jax.experimental.pallas import tpu as pltpu


# ----------------------------------------------------------------------------
# Kernel 1: width-Toeplitz formulation (small W * channels).
# ----------------------------------------------------------------------------
def _conv3x3_relu_toeplitz_kernel(x_ref, w_ref, o_ref, pad_ref, *, Nb, H, W,
                                  Cin, Cout, dil):
    # x_ref:   (Nb, H, W*Cin)         bf16, channels folded into the lane dim
    # w_ref:   (3, W*Cin, W*Cout)     bf16 width-Toeplitz weights (one per kh)
    # o_ref:   (Nb, H, W*Cout)        lane-dense output block
    # pad_ref: (Nb, H+2*dil, W*Cin)   f32 staging buffer (vertical halo only)
    #
    # Horizontal zero padding is already folded into w_ref; only the vertical
    # halo needs explicit zeros.  Zeroing the 2*dil halo rows every step keeps
    # the kernel correct for any grid order / megacore core assignment.
    zrow = jnp.zeros((Nb, dil, W * Cin), jnp.float32)
    pad_ref[:, :dil, :] = zrow
    pad_ref[:, dil + H:, :] = zrow
    pad_ref[:, dil:dil + H, :] = x_ref[...].astype(jnp.float32)

    # 3 MXU matmuls (one per kernel row), accumulated in f32 vregs -- no VMEM
    # accumulator traffic, single dense store at the end.
    acc = jnp.zeros((Nb * H, W * Cout), jnp.float32)
    for kh in range(3):
        lhs = pad_ref[:, kh * dil:kh * dil + H, :]            # (Nb, H, W*Cin)
        lhs = lhs.reshape(Nb * H, W * Cin).astype(jnp.bfloat16)
        acc = acc + jnp.dot(lhs, w_ref[kh],
                            preferred_element_type=jnp.float32)

    out = jnp.maximum(acc, 0.0)                               # fused ReLU
    o_ref[...] = out.reshape(Nb, H, W * Cout).astype(o_ref.dtype)


# ----------------------------------------------------------------------------
# Kernel 2: general fallback (large W / Cin / Cout -> K=Cin already dense).
# ----------------------------------------------------------------------------
def _conv3x3_relu_general_kernel(x_ref, w_ref, o_ref, pad_ref, *, Nb, H, W,
                                 Cin, Cout, dil):
    # x_ref:   (Nb, H, W, Cin)  bf16 NHWC block
    # w_ref:   (3, 3, Cin, Cout) bf16 HWIO weights
    # o_ref:   (Nb, H, W, Cout)
    # pad_ref: (Nb, H+2*dil, W+2*dil, Cin) f32 staging buffer (spatial halo)
    # NOTE: very large images (e.g. 256x256x256 on v7x, 64 MiB VMEM) would
    # additionally want H-strip spatial tiling with a 2*dil halo; not needed
    # at these shapes.
    Hp, Wp = H + 2 * dil, W + 2 * dil
    zrow = jnp.zeros((Nb, dil, Wp, Cin), jnp.float32)
    zcol = jnp.zeros((Nb, Hp, dil, Cin), jnp.float32)
    pad_ref[:, :dil, :, :] = zrow
    pad_ref[:, dil + H:, :, :] = zrow
    pad_ref[:, :, :dil, :] = zcol
    pad_ref[:, :, dil + W:, :] = zcol
    pad_ref[:, dil:dil + H, dil:dil + W, :] = x_ref[...].astype(jnp.float32)

    M = Nb * H * W
    acc = jnp.zeros((M, Cout), jnp.float32)          # f32 vreg accumulator
    for kh in range(3):
        for kw in range(3):
            patch = pad_ref[:, kh * dil:kh * dil + H, kw * dil:kw * dil + W, :]
            acc = acc + jnp.dot(patch.reshape(M, Cin).astype(jnp.bfloat16),
                                w_ref[kh, kw],
                                preferred_element_type=jnp.float32)
    out = jnp.maximum(acc, 0.0)
    o_ref[...] = out.reshape(Nb, H, W, Cout).astype(o_ref.dtype)


# ----------------------------------------------------------------------------
# Wrapper helpers.
# ----------------------------------------------------------------------------
def _pick_batch_block(N, bytes_per_image, budget=8 * 1024 * 1024):
    """Largest divisor of N that fits the VMEM budget while keeping >=2 grid
    steps (v7x has 2 TensorCores; a 1-step grid would idle one of them)."""
    if N <= 1:
        return 1
    best = 1
    for nb in range(1, N // 2 + 1):
        if N % nb == 0 and nb * bytes_per_image <= budget:
            best = nb
    return best


def _toeplitz_weights(weight_oihw, W, dil):
    """(Cout, Cin, 3, 3) -> (3, W*Cin, W*Cout): block-Toeplitz matrices that
    realize the kw/Cin contraction (and the horizontal zero padding) of a
    3x3 dilated 'same' conv as one matmul per kernel row kh."""
    Cout, Cin = weight_oihw.shape[:2]
    w_hwio = jnp.transpose(weight_oihw, (2, 3, 1, 0)).astype(jnp.float32)
    wi = jnp.arange(W)[:, None]      # input column  (w_in)
    wo = jnp.arange(W)[None, :]      # output column (w_out)
    # sel[kw, w_in, w_out] = 1 iff w_in == w_out + (kw-1)*dil; taps falling
    # outside [0, W) get no nonzero entry == zero padding.
    sel = jnp.stack([(wi == wo + (kw - 1) * dil) for kw in range(3)],
                    axis=0).astype(jnp.float32)
    rhs = jnp.einsum('kab,hkio->haibo', sel, w_hwio)  # (3, W, Cin, W, Cout)
    return rhs.reshape(3, W * Cin, W * Cout).astype(jnp.bfloat16)


def conv_layer_forward(x_nchw, weight_oihw, *, dilation=1):
    """Pallas equivalent of ConvLayer.forward (motion=False):
    Conv2d(k=3, padding=dilation, dilation=dilation, bias=False) + ReLU.

    x_nchw:      (N, Cin, H, W)
    weight_oihw: (Cout, Cin, 3, 3)
    returns:     (N, Cout, H, W), same dtype as x_nchw.
    """
    # TODO(synk): motion=True variant (Conv2d + BatchNorm2d + ReLU) is not
    # implemented; this kernel covers the default motion=False path.
    N, Cin, H, W = x_nchw.shape
    Cout = weight_oihw.shape[0]
    dil = int(dilation)
    out_dtype = x_nchw.dtype

    # NCHW -> NHWC (channels on lanes), bf16 in HBM (halves input traffic,
    # native MXU dtype).
    x_nhwc = jnp.transpose(x_nchw, (0, 2, 3, 1)).astype(jnp.bfloat16)

    # Rough per-image VMEM footprint (double-buffered blocks + staging + acc).
    itemsize_out = jnp.dtype(out_dtype).itemsize
    bytes_per_image = (
        2 * H * W * Cin * 2
        + 2 * H * W * Cout * itemsize_out
        + (H + 2 * dil) * (W + 2 * dil) * Cin * 4
        + 2 * H * W * Cout * 4)
    Nb = _pick_batch_block(N, bytes_per_image)
    grid = (N // Nb,)

    # Path choice: fold the kw/Cin contraction into width-Toeplitz weights
    # when the expansion stays small; otherwise use the general per-tap path.
    toeplitz_bytes = 3 * (W * Cin) * (W * Cout) * 2
    use_toeplitz = (toeplitz_bytes <= 4 * 1024 * 1024
                    and W * Cin <= 4096 and W * Cout <= 4096)

    est_vmem = Nb * bytes_per_image + (toeplitz_bytes if use_toeplitz
                                       else 9 * Cin * Cout * 2)
    vmem_limit = None
    if est_vmem > 24 * 1024 * 1024:
        # Leave headroom but stay under v7x's 64 MiB physical VMEM.
        vmem_limit = int(min(2 * est_vmem, 60 * 1024 * 1024))
    compiler_params = pltpu.CompilerParams(
        dimension_semantics=("parallel",),
        vmem_limit_bytes=vmem_limit)

    if use_toeplitz:
        x_flat = x_nhwc.reshape(N, H, W * Cin)          # free layout reshape
        w_toep = _toeplitz_weights(weight_oihw, W, dil)
        kernel = functools.partial(_conv3x3_relu_toeplitz_kernel,
                                   Nb=Nb, H=H, W=W, Cin=Cin, Cout=Cout,
                                   dil=dil)
        out_flat = pl.pallas_call(
            kernel,
            out_shape=jax.ShapeDtypeStruct((N, H, W * Cout), out_dtype),
            grid_spec=pltpu.PrefetchScalarGridSpec(
                num_scalar_prefetch=0,
                grid=grid,
                in_specs=[
                    pl.BlockSpec((Nb, H, W * Cin), lambda n: (n, 0, 0)),
                    pl.BlockSpec((3, W * Cin, W * Cout),
                                 lambda n: (0, 0, 0)),
                ],
                out_specs=pl.BlockSpec((Nb, H, W * Cout),
                                       lambda n: (n, 0, 0)),
                scratch_shapes=[
                    pltpu.VMEM((Nb, H + 2 * dil, W * Cin), jnp.float32)],
            ),
            compiler_params=compiler_params,
        )(x_flat, w_toep)
        out_nhwc = out_flat.reshape(N, H, W, Cout)
    else:
        w_hwio = jnp.transpose(weight_oihw, (2, 3, 1, 0)).astype(jnp.bfloat16)
        kernel = functools.partial(_conv3x3_relu_general_kernel,
                                   Nb=Nb, H=H, W=W, Cin=Cin, Cout=Cout,
                                   dil=dil)
        out_nhwc = pl.pallas_call(
            kernel,
            out_shape=jax.ShapeDtypeStruct((N, H, W, Cout), out_dtype),
            grid_spec=pltpu.PrefetchScalarGridSpec(
                num_scalar_prefetch=0,
                grid=grid,
                in_specs=[
                    pl.BlockSpec((Nb, H, W, Cin), lambda n: (n, 0, 0, 0)),
                    pl.BlockSpec((3, 3, Cin, Cout), lambda n: (0, 0, 0, 0)),
                ],
                out_specs=pl.BlockSpec((Nb, H, W, Cout),
                                       lambda n: (n, 0, 0, 0)),
                scratch_shapes=[
                    pltpu.VMEM((Nb, H + 2 * dil, W + 2 * dil, Cin),
                               jnp.float32)],
            ),
            compiler_params=compiler_params,
        )(x_nhwc, w_hwio)

    # NHWC -> NCHW to match the PyTorch module's output convention.
    return jnp.transpose(out_nhwc, (0, 3, 1, 2))


if __name__ == "__main__":
    # Small shapes consistent with the module: batch=2, in_channels=4,
    # out_channels=8, spatial=16x16, dilation=1.
    N, Cin, Cout, H, W = 2, 4, 8, 16, 16
    dilation = 1

    key = jax.random.PRNGKey(0)
    kx, kw = jax.random.split(key)
    x = jax.random.normal(kx, (N, Cin, H, W), dtype=jnp.float32)
    fan_in = Cin * 3 * 3
    weight = jax.random.normal(kw, (Cout, Cin, 3, 3), dtype=jnp.float32) * (
        2.0 / fan_in) ** 0.5

    out = conv_layer_forward(x, weight, dilation=dilation)
    out = jax.block_until_ready(out)

    # Reference: same bf16-rounded operands, exact f32 conv + ReLU (the kernel
    # runs bf16 on the MXU with f32 accumulation).
    xr = x.astype(jnp.bfloat16).astype(jnp.float32)
    wr = weight.astype(jnp.bfloat16).astype(jnp.float32)
    ref = jax.lax.conv_general_dilated(
        xr, wr,
        window_strides=(1, 1),
        padding=((dilation, dilation), (dilation, dilation)),
        rhs_dilation=(dilation, dilation),
        dimension_numbers=("NCHW", "OIHW", "NCHW"),
        precision=jax.lax.Precision.HIGHEST,
    )
    ref = jnp.maximum(ref, 0.0)

    assert out.shape == (N, Cout, H, W)
    assert jnp.allclose(out, ref, atol=2e-3, rtol=2e-3), float(
        jnp.max(jnp.abs(out - ref)))

    print("KERNEL_OK")
</pallas_src>

<mosaic_0001>
module attributes {stable_mosaic.version = 11 : i64} {
  func.func @_conv3x3_relu_toeplitz_kernel(%arg0: i32, %arg1: memref<1x16x64xbf16, #tpu.memory_space<vmem>>, %arg2: memref<3x64x128xbf16, #tpu.memory_space<vmem>>, %arg3: memref<1x16x128xf32, #tpu.memory_space<vmem>>, %arg4: memref<1x18x64xf32, #tpu.memory_space<vmem>>) attributes {dimension_semantics = [#tpu.dimension_semantics<parallel>], iteration_bounds = array<i64: 2>, scalar_prefetch = 0 : i64, scratch_operands = 1 : i64, tpu.core_type = #tpu.core_type<tc>, window_params = [{transform_indices = @transform_0, window_bounds = array<i64: 1, 16, 64>}, {pipeline_mode = #tpu.pipeline_mode<synchronous>, transform_indices = @transform_1, window_bounds = array<i64: 3, 64, 128>}, {transform_indices = @transform_2, window_bounds = array<i64: 1, 16, 128>}]} {
    %cst = arith.constant 0.000000e+00 : f32
    %0 = vector.broadcast %cst : f32 to vector<1x1x64xf32>
    %c0 = arith.constant 0 : index
    %c0_0 = arith.constant 0 : index
    %c0_1 = arith.constant 0 : index
    %1 = vector.load %arg4[%c0, %c0_0, %c0_1] : memref<1x18x64xf32, #tpu.memory_space<vmem>>, vector<1x1x64xf32>
    tpu.vector_store %arg4[%c0, %c0_0, %c0_1], %0 {strides = array<i32>} : memref<1x18x64xf32, #tpu.memory_space<vmem>>, vector<1x1x64xf32>,
    %c0_2 = arith.constant 0 : index
    %c17 = arith.constant 17 : index
    %c0_3 = arith.constant 0 : index
    %2 = vector.load %arg4[%c0_2, %c17, %c0_3] : memref<1x18x64xf32, #tpu.memory_space<vmem>>, vector<1x1x64xf32>
    tpu.vector_store %arg4[%c0_2, %c17, %c0_3], %0 {strides = array<i32>} : memref<1x18x64xf32, #tpu.memory_space<vmem>>, vector<1x1x64xf32>,
    %c0_4 = arith.constant 0 : index
    %c0_5 = arith.constant 0 : index
    %c0_6 = arith.constant 0 : index
    %3 = vector.load %arg1[%c0_4, %c0_5, %c0_6] : memref<1x16x64xbf16, #tpu.memory_space<vmem>>, vector<1x16x64xbf16>
    %4 = arith.extf %3 : vector<1x16x64xbf16> to vector<1x16x64xf32>
    %c0_7 = arith.constant 0 : index
    %c1 = arith.constant 1 : index
    %c0_8 = arith.constant 0 : index
    %5 = vector.load %arg4[%c0_7, %c1, %c0_8] : memref<1x18x64xf32, #tpu.memory_space<vmem>>, vector<1x16x64xf32>
    tpu.vector_store %arg4[%c0_7, %c1, %c0_8], %4 {strides = array<i32>} : memref<1x18x64xf32, #tpu.memory_space<vmem>>, vector<1x16x64xf32>,
    %cst_9 = arith.constant 0.000000e+00 : f32
    %6 = vector.broadcast %cst_9 : f32 to vector<16x128xf32>
    %c0_10 = arith.constant 0 : index
    %c0_11 = arith.constant 0 : index
    %c0_12 = arith.constant 0 : index
    %7 = vector.load %arg4[%c0_10, %c0_11, %c0_12] : memref<1x18x64xf32, #tpu.memory_space<vmem>>, vector<1x16x64xf32>
    %8 = vector.shape_cast %7 : vector<1x16x64xf32> to vector<16x64xf32>
    %9 = arith.truncf %8 : vector<16x64xf32> to vector<16x64xbf16>
    %c0_13 = arith.constant 0 : index
    %c0_14 = arith.constant 0 : index
    %c0_15 = arith.constant 0 : index
    %10 = vector.load %arg2[%c0_13, %c0_14, %c0_15] : memref<3x64x128xbf16, #tpu.memory_space<vmem>>, vector<1x64x128xbf16>
    %11 = vector.shape_cast %10 : vector<1x64x128xbf16> to vector<64x128xbf16>
    %cst_16 = arith.constant dense<0.000000e+00> : vector<16x128xf32>
    %12 = tpu.matmul %9, %11, %cst_16 {dimension_numbers = #tpu.dot_dimension_numbers<[1], [0], [0], [1], [0, 0, 1, 1], [], []>} : vector<16x64xbf16>, vector<64x128xbf16>, vector<16x128xf32> -> vector<16x128xf32>
    %13 = arith.addf %6, %12 : vector<16x128xf32>
    %c0_17 = arith.constant 0 : index
    %c1_18 = arith.constant 1 : index
    %c0_19 = arith.constant 0 : index
    %14 = vector.load %arg4[%c0_17, %c1_18, %c0_19] : memref<1x18x64xf32, #tpu.memory_space<vmem>>, vector<1x16x64xf32>
    %15 = vector.shape_cast %14 : vector<1x16x64xf32> to vector<16x64xf32>
    %16 = arith.truncf %15 : vector<16x64xf32> to vector<16x64xbf16>
    %c1_20 = arith.constant 1 : index
    %c0_21 = arith.constant 0 : index
    %c0_22 = arith.constant 0 : index
    %17 = vector.load %arg2[%c1_20, %c0_21, %c0_22] : memref<3x64x128xbf16, #tpu.memory_space<vmem>>, vector<1x64x128xbf16>
    %18 = vector.shape_cast %17 : vector<1x64x128xbf16> to vector<64x128xbf16>
    %cst_23 = arith.constant dense<0.000000e+00> : vector<16x128xf32>
    %19 = tpu.matmul %16, %18, %cst_23 {dimension_numbers = #tpu.dot_dimension_numbers<[1], [0], [0], [1], [0, 0, 1, 1], [], []>} : vector<16x64xbf16>, vector<64x128xbf16>, vector<16x128xf32> -> vector<16x128xf32>
    %20 = arith.addf %13, %19 : vector<16x128xf32>
    %c0_24 = arith.constant 0 : index
    %c2 = arith.constant 2 : index
    %c0_25 = arith.constant 0 : index
    %21 = vector.load %arg4[%c0_24, %c2, %c0_25] : memref<1x18x64xf32, #tpu.memory_space<vmem>>, vector<1x16x64xf32>
    %22 = vector.shape_cast %21 : vector<1x16x64xf32> to vector<16x64xf32>
    %23 = arith.truncf %22 : vector<16x64xf32> to vector<16x64xbf16>
    %c2_26 = arith.constant 2 : index
    %c0_27 = arith.constant 0 : index
    %c0_28 = arith.constant 0 : index
    %24 = vector.load %arg2[%c2_26, %c0_27, %c0_28] : memref<3x64x128xbf16, #tpu.memory_space<vmem>>, vector<1x64x128xbf16>
    %25 = vector.shape_cast %24 : vector<1x64x128xbf16> to vector<64x128xbf16>
    %cst_29 = arith.constant dense<0.000000e+00> : vector<16x128xf32>
    %26 = tpu.matmul %23, %25, %cst_29 {dimension_numbers = #tpu.dot_dimension_numbers<[1], [0], [0], [1], [0, 0, 1, 1], [], []>} : vector<16x64xbf16>, vector<64x128xbf16>, vector<16x128xf32> -> vector<16x128xf32>
    %27 = arith.addf %20, %26 : vector<16x128xf32>
    %cst_30 = arith.constant 0.000000e+00 : f32
    %28 = vector.broadcast %cst_30 : f32 to vector<16x128xf32>
    %29 = arith.maximumf %27, %28 : vector<16x128xf32>
    %30 = vector.shape_cast %29 : vector<16x128xf32> to vector<1x16x128xf32>
    %c0_31 = arith.constant 0 : index
    %c0_32 = arith.constant 0 : index
    %c0_33 = arith.constant 0 : index
    %31 = vector.load %arg3[%c0_31, %c0_32, %c0_33] : memref<1x16x128xf32, #tpu.memory_space<vmem>>, vector<1x16x128xf32>
    tpu.vector_store %arg3[%c0_31, %c0_32, %c0_33], %30 {strides = array<i32>} : memref<1x16x128xf32, #tpu.memory_space<vmem>>, vector<1x16x128xf32>,
    return
  }
  func.func @transform_0(%arg0: i32) -> (i32, i32, i32) {
    %c0_i32 = arith.constant 0 : i32
    %c0_i32_0 = arith.constant 0 : i32
    %c0_i32_1 = arith.constant 0 : i32
    return %arg0, %c0_i32, %c0_i32_0 : i32, i32, i32
  }
  func.func @transform_1(%arg0: i32) -> (i32, i32, i32) {
    %c0_i32 = arith.constant 0 : i32
    %c0_i32_0 = arith.constant 0 : i32
    %c0_i32_1 = arith.constant 0 : i32
    %c0_i32_2 = arith.constant 0 : i32
    return %c0_i32, %c0_i32_0, %c0_i32_1 : i32, i32, i32
  }
  func.func @transform_2(%arg0: i32) -> (i32, i32, i32) {
    %c0_i32 = arith.constant 0 : i32
    %c0_i32_0 = arith.constant 0 : i32
    %c0_i32_1 = arith.constant 0 : i32
    return %arg0, %c0_i32, %c0_i32_0 : i32, i32, i32
  }
}

</mosaic_0001>

<llo_original>
// kernel: tpu_custom_call.1
$region0: #{tpu_custom_call.1}
  #allocation0 [shape = 'u32[]', space=smem, size = 0x4, offset = 0x4, fixed_abs, tag = 'smem constant byte address 0x4 - core index']
  #allocation1 [shape = 'u32[144,128]{1,0:T(1,128)}', space=vmem, size = 0x12000, scoped, tag = 'internal scratch']
  #allocation2 [shape = 'f32[1,18,64]{2,1,0:T(8,128)}', space=vmem, size = 0x3000, scoped, tag = 'scratch operand']
  %s0 = inlined_call_operand.hbm [shape: bf16[2,16,64], index: 0, kind: input, shape index: {}]
  %s1 = inlined_call_operand.hbm [shape: bf16[3,64,128], index: 1, kind: input, shape index: {}]
  %s2 = inlined_call_operand.hbm [shape: f32[2,16,128], index: 2, kind: output, shape index: {}]
  %s3 = sld [smem:[#allocation0]]
  $region49: #{tpu_custom_call.1} parent=0
    _
  %s5 = ssub.s32 1, %s3
  %s6 = scalar_select 0, %s5, %s3
  $region1: #{tpu_custom_call.1} parent=0
    #allocation3 [shape = 'u8[8192]{0}', space=vmem, size = 0x2000, scoped, tag = 'input window, operand 0']
    #allocation4 [shape = 's32[2]{0}', space=sflag, size = 0x8, scoped, tag = 'scoped memory for tpu_custom_call.1']
    #allocation5 [shape = 's32[2]{0}', space=sflag, size = 0x8, scoped, tag = 'scoped memory for tpu_custom_call.1']
    #allocation6 [shape = 'u8[49152]{0}', space=vmem, size = 0xc000, scoped, tag = 'input window, operand 1, single buffered']
    #allocation7 [shape = 's32[1]{0}', space=sflag, size = 0x4, scoped, tag = 'scoped memory for tpu_custom_call.1']
    #allocation8 [shape = 'u8[16384]{0}', space=vmem, size = 0x4000, scoped, tag = 'output window, operand 0']
    %7 = vsyncpa [#allocation4], 0
    %s8 = scalar_lea.sflag [#allocation4], 1
    %9 = vsyncpa %s8, 0
    %10 = vsyncpa [#allocation7], 0
    %11 = vsyncpa [#allocation5], 0
    %s12 = scalar_lea.sflag [#allocation5], 1
    %13 = vsyncpa %s12, 0
    loop: start=0, step=1, limit=4
    $region2: #{tpu_custom_call.1} parent=1 // loop_pre_header
      _
    $region3: #{tpu_custom_call.1} parent=1 // loop_header
      %s15 = sphi 0, %s19
      %p16 = scmp.ge.s32.totalorder %s15, 4
      %s25 = sphi 0, %s27
      %s28 = sphi 0, %s25
      %s29 = sphi 0, %s28
      %s45 = sphi 0, %s29
      %s49 = sphi 0, %s49
      %s51 = sphi 0, %s49
      %s52 = sphi 0, %s51
      %s66 = sphi 0, %s52
      %s72 = sphi 0, %s74
      %s75 = sphi 0, %s72
      %s76 = sphi 0, %s75
      %s92 = sphi 0, %s76
    $region4: #{tpu_custom_call.1} parent=1 // loop_header_branch
      %18 = sbr.rel (%p16) target = $region8
    $region5: #{tpu_custom_call.1} parent=1 // loop_body
      %s20 = ssub.s32 %s15, 1
      %s21 = ssub.s32 %s15, 2
      %s22 = sadd.s32 %s15, 1
      %s23 = ssub.s32 %s15, %s22
      %p24 = scmp.eq.s32.totalorder %s23, 0
      %s26 = sadd.s32 %s25, 1
      %s27 = scalar_select %p24, %s25, %s26
      %p30 = pneg %p24
      %p31 = scmp.eq.s32.totalorder %s15, 1
      %p32 = por %p30, %p31
      %p33 = scmp.ne.s32.totalorder %s25, %s28
      %p34 = scmp.eq.s32.totalorder %s15, 0
      %p35 = por %p33, %p34
      %p36 = scmp.ne.s32.totalorder %s25, %s28
      %p37 = scmp.eq.s32.totalorder %s20, 1
      %p38 = por %p36, %p37
      %p39 = scmp.ne.s32.totalorder %s28, %s29
      %p40 = scmp.eq.s32.totalorder %s20, 0
      %p41 = por %p39, %p40
      %p42 = scmp.ne.s32.totalorder %s28, %s29
      %p43 = scmp.eq.s32.totalorder %s21, 1
      %p44 = por %p42, %p43
      %p46 = scmp.ne.s32.totalorder %s29, %s45
      %p47 = scmp.eq.s32.totalorder %s21, 0
      %p48 = por %p46, %p47
      %s50 = sadd.s32 %s49, 1
      %p53 = scmp.eq.s32.totalorder %s15, 1
      %p54 = scmp.ne.s32.totalorder %s49, %s51
      %p55 = scmp.eq.s32.totalorder %s15, 0
      %p56 = por %p54, %p55
      %p57 = scmp.ne.s32.totalorder %s49, %s51
      %p58 = scmp.eq.s32.totalorder %s20, 1
      %p59 = por %p57, %p58
      %p60 = scmp.ne.s32.totalorder %s51, %s52
      %p61 = scmp.eq.s32.totalorder %s20, 0
      %p62 = por %p60, %p61
      %p63 = scmp.ne.s32.totalorder %s51, %s52
      %p64 = scmp.eq.s32.totalorder %s21, 1
      %p65 = por %p63, %p64
      %p67 = scmp.ne.s32.totalorder %s52, %s66
      %p68 = scmp.eq.s32.totalorder %s21, 0
      %p69 = por %p67, %p68
      %s70 = ssub.s32 %s15, %s22
      %p71 = scmp.eq.s32.totalorder %s70, 0
      %s73 = sadd.s32 %s72, 1
      %s74 = scalar_select %p71, %s72, %s73
      %p77 = pneg %p71
      %p78 = scmp.eq.s32.totalorder %s15, 1
      %p79 = por %p77, %p78
      %p80 = scmp.ne.s32.totalorder %s72, %s75
      %p81 = scmp.eq.s32.totalorder %s15, 0
      %p82 = por %p80, %p81
      %p83 = scmp.ne.s32.totalorder %s72, %s75
      %p84 = scmp.eq.s32.totalorder %s20, 1
      %p85 = por %p83, %p84
      %p86 = scmp.ne.s32.totalorder %s75, %s76
      %p87 = scmp.eq.s32.totalorder %s20, 0
      %p88 = por %p86, %p87
      %p89 = scmp.ne.s32.totalorder %s75, %s76
      %p90 = scmp.eq.s32.totalorder %s21, 1
      %p91 = por %p89, %p90
      %p93 = scmp.ne.s32.totalorder %s76, %s92
      %p94 = scmp.eq.s32.totalorder %s21, 0
      %p95 = por %p93, %p94
      %p96 = scmp.le.s32.totalorder 1, %s15
      %p97 = scmp.lt.s32.totalorder %s15, 3
      %p98 = pnand %p96, %p97
      %p99 = pneg %p98
      // Predicated region
      $region9: #{tpu_custom_call.1} parent=5 // pred_check
        _
      $region10: #{tpu_custom_call.1} parent=5 // pred_check_branch
        %101 = sbr.rel (%p98) target = $region12
      $region11: #{tpu_custom_call.1} parent=5 // pred_region
        %s102 = ssub.s32 %s15, 1
        // Predicated region
        $region13: #{tpu_custom_call.1} parent=11 // pred_check
          %p103 = pneg %p62
        $region14: #{tpu_custom_call.1} parent=11 // pred_check_branch
          %105 = sbr.rel (%p103) target = $region16
        $region15: #{tpu_custom_call.1} parent=11 // pred_region
          %s107 = ssub.s32 1536, 1536
          %108 = vsyncadd [#allocation7], %s107
          %s109 = sshll.u32 [#allocation6], 4
          %s110 = int_to_ptr.vmem [resolvable:$true] %s109
          %115 = dma.hbm_to_vmem [thread:$0]  %s1, 1536, %s110, [#allocation7], 64, 64, 4
        $region16: #{tpu_custom_call.1} parent=11 // pred_fallthru
          _
      $region12: #{tpu_custom_call.1} parent=5 // pred_fallthru
        _
      %p116 = scmp.lt.s32.totalorder %s15, 2
      // Predicated region
      $region17: #{tpu_custom_call.1} parent=5 // pred_check
        %p117 = pneg %p116
      $region18: #{tpu_custom_call.1} parent=5 // pred_check_branch
        %119 = sbr.rel (%p117) target = $region20
      $region19: #{tpu_custom_call.1} parent=5 // pred_region
        // Predicated region
        $region21: #{tpu_custom_call.1} parent=19 // pred_check
          %p120 = pneg %p35
        $region22: #{tpu_custom_call.1} parent=19 // pred_check_branch
          %122 = sbr.rel (%p120) target = $region24
        $region23: #{tpu_custom_call.1} parent=19 // pred_region
          %s123 = sand.u32 %s25, 1
          %s124 = scalar_lea.sflag [#allocation4], %s123
          %s125 = sand.u32 %s25, 1
          %s126 = smul.addr %s125, 8
          %s127 = scalar_lea.vmem [#allocation3], %s126
          %s129 = ssub.s32 128, 128
          %130 = vsyncadd %s124, %s129
          %s131 = smul.addr %s15, 2
          %s132 = smul.addr %s131, 64
          %s133 = scalar_lea.hbm %s0, %s132
          %s134 = sshll.u32 %s127, 4
          %s135 = int_to_ptr.vmem [resolvable:$true] %s134
          %140 = dma.hbm_to_vmem [thread:$0]  %s133, 128, %s135, %s124, 64, 64, 4
        $region24: #{tpu_custom_call.1} parent=19 // pred_fallthru
          _
      $region20: #{tpu_custom_call.1} parent=5 // pred_fallthru
        _
      %p141 = scmp.le.s32.totalorder 1, %s15
      %p142 = scmp.lt.s32.totalorder %s15, 3
      %p143 = pnand %p141, %p142
      %p144 = pneg %p143
      // Predicated region
      $region25: #{tpu_custom_call.1} parent=5 // pred_check
        _
      $region26: #{tpu_custom_call.1} parent=5 // pred_check_branch
        %146 = sbr.rel (%p143) target = $region28
      $region27: #{tpu_custom_call.1} parent=5 // pred_region
        %s147 = ssub.s32 %s15, 1
        %s148 = sand.u32 %s28, 1
        %s149 = scalar_lea.sflag [#allocation4], %s148
        %s150 = sand.u32 %s28, 1
        %s151 = smul.addr %s150, 8
        %s152 = scalar_lea.vmem [#allocation3], %s151
        // Predicated region
        $region29: #{tpu_custom_call.1} parent=27 // pred_check
          %p153 = pneg %p41
        $region30: #{tpu_custom_call.1} parent=27 // pred_check_branch
          %155 = sbr.rel (%p153) target = $region32
        $region31: #{tpu_custom_call.1} parent=27 // pred_region
          %156 = dma.done %s149, 128
        $region32: #{tpu_custom_call.1} parent=27 // pred_fallthru
          _
        // Predicated region
        $region33: #{tpu_custom_call.1} parent=27 // pred_check
          %p157 = pneg %p62
        $region34: #{tpu_custom_call.1} parent=27 // pred_check_branch
          %159 = sbr.rel (%p157) target = $region36
        $region35: #{tpu_custom_call.1} parent=27 // pred_region
          %160 = dma.done [#allocation7], 1536
        $region36: #{tpu_custom_call.1} parent=27 // pred_fallthru
          _
        %s161 = sand.u32 %s28, 1
        %s162 = scalar_lea.sflag [#allocation4], %s161
        %s163 = sand.u32 %s28, 1
        %s164 = smul.addr %s163, 8
        %s165 = scalar_lea.vmem [#allocation3], %s164
        %p166 = pneg %p41
        %p167 = pneg %p38
        %p168 = pneg %p62
        %p169 = pneg %p59
        %p170 = pneg %p88
        %p171 = pneg %p85
        %s172 = sand.u32 %s75, 1
        %s173 = scalar_lea.sflag [#allocation5], %s172
        %s174 = sand.u32 %s75, 1
        %s175 = smul.addr %s174, 16
        %s176 = scalar_lea.vmem [#allocation8], %s175
        %vm178 = vcmask 516096
        %179 = vst.msk [vmem:[#allocation2] sm:$0x1] %vm178, 0.0
        %180 = vst.msk [vmem:[#allocation2 + $0x11] sm:$0x1] %vm178, 0.0
        %v181 = vld [vmem:[%s152] sm:$0xf]
        %v182 = vld [vmem:[%s152 + $0x4] sm:$0xf]
        %v183 = vunpack.c.l.bf16 %v181
        %v184 = vunpack.c.l.bf16 %v182
        %vm185 = vcmask 523264
        %186 = vst.msk [vmem:[#allocation2 + $0x1] sm:$0xff] %vm185, %v183
        %187 = vst.msk [vmem:[#allocation2 + $0x9] sm:$0xff] %vm185, %v184
        %v188 = vld [vmem:[#allocation2] sm:$0xff]
        %v189 = vld [vmem:[#allocation2 + $0x8] sm:$0xff]
        %v190 = vpack.c.bf16 %v189, %v188
        %v191 = vld [vmem:[#allocation6] sm:$0xf]
        %v192 = vld [vmem:[#allocation6 + $0x4] sm:$0xf]
        %v193 = vld [vmem:[#allocation6 + $0x8] sm:$0xf]
        %v194 = vld [vmem:[#allocation6 + $0xc] sm:$0xf]
        %v195 = vld [vmem:[#allocation6 + $0x10] sm:$0xf]
        %v196 = vld [vmem:[#allocation6 + $0x14] sm:$0xf]
        %v197 = vld [vmem:[#allocation6 + $0x18] sm:$0xf]
        %v198 = vld [vmem:[#allocation6 + $0x1c] sm:$0xf]
        %v199 = vld [vmem:[#allocation2 + $0x1] sm:$0xff]
        %v200 = vld [vmem:[#allocation2 + $0x9] sm:$0xff]
        %v201 = vpack.c.bf16 %v200, %v199
        %s202 = scalar_lea.vmem [#allocation6], 32
        %v203 = vld [vmem:[%s202] sm:$0xf]
        %v204 = vld [vmem:[%s202 + $0x4] sm:$0xf]
        %v205 = vld [vmem:[%s202 + $0x8] sm:$0xf]
        %v206 = vld [vmem:[%s202 + $0xc] sm:$0xf]
        %v207 = vld [vmem:[%s202 + $0x10] sm:$0xf]
        %v208 = vld [vmem:[%s202 + $0x14] sm:$0xf]
        %v209 = vld [vmem:[%s202 + $0x18] sm:$0xf]
        %v210 = vld [vmem:[%s202 + $0x1c] sm:$0xf]
        %v219 = vunpack.c.l.b16 %v203
        %v220 = vunpack.c.l.b16 %v204
        %v221 = vunpack.c.l.b16 %v205
        %v222 = vunpack.c.l.b16 %v206
        %v223 = vunpack.c.l.b16 %v207
        %v224 = vunpack.c.l.b16 %v208
        %v225 = vunpack.c.l.b16 %v209
        %v226 = vunpack.c.l.b16 %v210
        %v227 = vpack.c.b16 %v220, %v219
        %v228 = vpack.c.b16 %v222, %v221
        %v229 = vpack.c.b16 %v224, %v223
        %v230 = vpack.c.b16 %v226, %v225
        %v236 = vsel %vm185, %v201, 0
        %238 = vmatprep.subr.bf16.mxu0 0
        %239 = vmatpush1.bf16.msra.mxu0 0
        %240 = vmatprep.subr.bf16.mxu0 0
        %241 = vmatpush1.bf16.msra.mxu0 0
        %242 = vmatprep.subr.bf16.mxu0 0
        %243 = vmatpush1.bf16.msra.mxu0 0
        %244 = vmatprep.subr.bf16.mxu0 0
        %245 = vmatpush1.bf16.msra.mxu0 0
        %246 = vmatprep.subr.bf16.mxu0 0
        %247 = vmatpush1.bf16.msra.mxu0 %v230
        %248 = vmatprep.subr.bf16.mxu0 0
        %249 = vmatpush1.bf16.msra.mxu0 %v229
        %250 = vmatprep.subr.bf16.mxu0 0
        %251 = vmatpush1.bf16.msra.mxu0 %v228
        %252 = vmatprep.subr.bf16.mxu0 0
        %253 = vmatpush1.bf16.msra.mxu0 %v227
        %254 = vmatprep.subr.bf16.mxu0 0
        %255 = vmatpush2.bf16.msra.mxu0 0
        %256 = vmatprep.subr.bf16.mxu0 0
        %257 = vmatpush2.bf16.msra.mxu0 0
        %258 = vmatprep.subr.bf16.mxu0 0
        %259 = vmatpush2.bf16.msra.mxu0 0
        %260 = vmatprep.subr.bf16.mxu0 0
        %261 = vmatpush2.bf16.msra.mxu0 0
        %262 = vmatprep.subr.bf16.mxu0 0
        %263 = vmatpush2.bf16.msra.mxu0 0
        %264 = vmatprep.subr.bf16.mxu0 0
        %265 = vmatpush2.bf16.msra.mxu0 0
        %266 = vmatprep.subr.bf16.mxu0 0
        %267 = vmatpush2.bf16.msra.mxu0 0
        %268 = vmatprep.subr.bf16.mxu0 0
        %269 = vmatpush2.bf16.msra.mxu0 0
        %270 = vmatprep.mubr.bf16.mxu0 0
        %271 = vmatmul.mubr.bf16.gmra.mxu0 %v236
        %v272 = vpop.f32.mrf.mxu0
        %v273 = vadd.f32 0.0, %v272
        %v274 = vpop.f32.mrf.mxu0
        %v275 = vpop.f32.mrf.mxu0
        %v276 = vadd.f32 0.0, %v275
        %v277 = vpop.f32.mrf.mxu0
        %278 = vdwg.mxu0
        %v287 = vunpack.c.l.b16 %v191
        %v288 = vunpack.c.l.b16 %v192
        %v289 = vunpack.c.l.b16 %v193
        %v290 = vunpack.c.l.b16 %v194
        %v291 = vunpack.c.l.b16 %v195
        %v292 = vunpack.c.l.b16 %v196
        %v293 = vunpack.c.l.b16 %v197
        %v294 = vunpack.c.l.b16 %v198
        %v295 = vpack.c.b16 %v288, %v287
        %v296 = vpack.c.b16 %v290, %v289
        %v297 = vpack.c.b16 %v292, %v291
        %v298 = vpack.c.b16 %v294, %v293
        %v304 = vsel %vm185, %v190, 0
        %306 = vmatprep.subr.bf16.mxu0 0
        %307 = vmatpush1.bf16.msra.mxu0 0
        %308 = vmatprep.subr.bf16.mxu0 0
        %309 = vmatpush1.bf16.msra.mxu0 0
        %310 = vmatprep.subr.bf16.mxu0 0
        %311 = vmatpush1.bf16.msra.mxu0 0
        %312 = vmatprep.subr.bf16.mxu0 0
        %313 = vmatpush1.bf16.msra.mxu0 0
        %314 = vmatprep.subr.bf16.mxu0 0
        %315 = vmatpush1.bf16.msra.mxu0 %v298
        %316 = vmatprep.subr.bf16.mxu0 0
        %317 = vmatpush1.bf16.msra.mxu0 %v297
        %318 = vmatprep.subr.bf16.mxu0 0
        %319 = vmatpush1.bf16.msra.mxu0 %v296
        %320 = vmatprep.subr.bf16.mxu0 0
        %321 = vmatpush1.bf16.msra.mxu0 %v295
        %322 = vmatprep.subr.bf16.mxu0 0
        %323 = vmatpush2.bf16.msra.mxu0 0
        %324 = vmatprep.subr.bf16.mxu0 0
        %325 = vmatpush2.bf16.msra.mxu0 0
        %326 = vmatprep.subr.bf16.mxu0 0
        %327 = vmatpush2.bf16.msra.mxu0 0
        %328 = vmatprep.subr.bf16.mxu0 0
        %329 = vmatpush2.bf16.msra.mxu0 0
        %330 = vmatprep.subr.bf16.mxu0 0
        %331 = vmatpush2.bf16.msra.mxu0 0
        %332 = vmatprep.subr.bf16.mxu0 0
        %333 = vmatpush2.bf16.msra.mxu0 0
        %334 = vmatprep.subr.bf16.mxu0 0
        %335 = vmatpush2.bf16.msra.mxu0 0
        %336 = vmatprep.subr.bf16.mxu0 0
        %337 = vmatpush2.bf16.msra.mxu0 0
        %338 = vmatprep.mubr.bf16.mxu0 0
        %339 = vmatmul.mubr.bf16.gmra.mxu0 %v304
        %v340 = vpop.f32.mrf.mxu0
        %v341 = vadd.f32 %v273, %v340
        %v342 = vpop.f32.mrf.mxu0
        %v343 = vpop.f32.mrf.mxu0
        %v344 = vadd.f32 %v276, %v343
        %v345 = vpop.f32.mrf.mxu0
        %346 = vdwg.mxu0
        %v347 = vld [vmem:[#allocation2 + $0x2] sm:$0xff]
        %v348 = vld [vmem:[#allocation2 + $0xa] sm:$0xff]
        %v349 = vpack.c.bf16 %v348, %v347
        %s350 = scalar_lea.vmem [#allocation6], 64
        %v351 = vld [vmem:[%s350] sm:$0xf]
        %v352 = vld [vmem:[%s350 + $0x4] sm:$0xf]
        %v353 = vld [vmem:[%s350 + $0x8] sm:$0xf]
        %v354 = vld [vmem:[%s350 + $0xc] sm:$0xf]
        %v355 = vld [vmem:[%s350 + $0x10] sm:$0xf]
        %v356 = vld [vmem:[%s350 + $0x14] sm:$0xf]
        %v357 = vld [vmem:[%s350 + $0x18] sm:$0xf]
        %v358 = vld [vmem:[%s350 + $0x1c] sm:$0xf]
        %v367 = vunpack.c.l.b16 %v351
        %v368 = vunpack.c.l.b16 %v352
        %v369 = vunpack.c.l.b16 %v353
        %v370 = vunpack.c.l.b16 %v354
        %v371 = vunpack.c.l.b16 %v355
        %v372 = vunpack.c.l.b16 %v356
        %v373 = vunpack.c.l.b16 %v357
        %v374 = vunpack.c.l.b16 %v358
        %v375 = vpack.c.b16 %v368, %v367
        %v376 = vpack.c.b16 %v370, %v369
        %v377 = vpack.c.b16 %v372, %v371
        %v378 = vpack.c.b16 %v374, %v373
        %v384 = vsel %vm185, %v349, 0
        %386 = vmatprep.subr.bf16.mxu0 0
        %387 = vmatpush1.bf16.msra.mxu0 0
        %388 = vmatprep.subr.bf16.mxu0 0
        %389 = vmatpush1.bf16.msra.mxu0 0
        %390 = vmatprep.subr.bf16.mxu0 0
        %391 = vmatpush1.bf16.msra.mxu0 0
        %392 = vmatprep.subr.bf16.mxu0 0
        %393 = vmatpush1.bf16.msra.mxu0 0
        %394 = vmatprep.subr.bf16.mxu0 0
        %395 = vmatpush1.bf16.msra.mxu0 %v378
        %396 = vmatprep.subr.bf16.mxu0 0
        %397 = vmatpush1.bf16.msra.mxu0 %v377
        %398 = vmatprep.subr.bf16.mxu0 0
        %399 = vmatpush1.bf16.msra.mxu0 %v376
        %400 = vmatprep.subr.bf16.mxu0 0
        %401 = vmatpush1.bf16.msra.mxu0 %v375
        %402 = vmatprep.subr.bf16.mxu0 0
        %403 = vmatpush2.bf16.msra.mxu0 0
        %404 = vmatprep.subr.bf16.mxu0 0
        %405 = vmatpush2.bf16.msra.mxu0 0
        %406 = vmatprep.subr.bf16.mxu0 0
        %407 = vmatpush2.bf16.msra.mxu0 0
        %408 = vmatprep.subr.bf16.mxu0 0
        %409 = vmatpush2.bf16.msra.mxu0 0
        %410 = vmatprep.subr.bf16.mxu0 0
        %411 = vmatpush2.bf16.msra.mxu0 0
        %412 = vmatprep.subr.bf16.mxu0 0
        %413 = vmatpush2.bf16.msra.mxu0 0
        %414 = vmatprep.subr.bf16.mxu0 0
        %415 = vmatpush2.bf16.msra.mxu0 0
        %416 = vmatprep.subr.bf16.mxu0 0
        %417 = vmatpush2.bf16.msra.mxu0 0
        %418 = vmatprep.mubr.bf16.mxu0 0
        %419 = vmatmul.mubr.bf16.gmra.mxu0 %v384
        %v420 = vpop.f32.mrf.mxu0
        %v421 = vadd.f32 0.0, %v420
        %v422 = vpop.f32.mrf.mxu0
        %v423 = vpop.f32.mrf.mxu0
        %v424 = vadd.f32 0.0, %v423
        %v425 = vpop.f32.mrf.mxu0
        %426 = vdwg.mxu0
        %v427 = vadd.f32 %v341, %v421
        %v428 = vadd.f32 %v344, %v424
        %v429 = vmax.f32 %v427, 0.0
        %v430 = vmax.f32 %v428, 0.0
        %431 = vst [vmem:[%s176] sm:$0xff] %v429
        %432 = vst [vmem:[%s176 + $0x8] sm:$0xff] %v430
        %s433 = sand.u32 %s75, 1
        %s434 = scalar_lea.sflag [#allocation5], %s433
        %s435 = sand.u32 %s75, 1
        %s436 = smul.addr %s435, 16
        %s437 = scalar_lea.vmem [#allocation8], %s436
        // Predicated region
        $region37: #{tpu_custom_call.1} parent=27 // pred_check
          %p438 = pneg %p85
        $region38: #{tpu_custom_call.1} parent=27 // pred_check_branch
          %440 = sbr.rel (%p438) target = $region40
        $region39: #{tpu_custom_call.1} parent=27 // pred_region
          %s442 = ssub.s32 256, 256
          %443 = vsyncadd %s434, %s442
          %s444 = smul.addr %s20, 2
          %s445 = smul.addr %s444, 128
          %s446 = scalar_lea.hbm %s2, %s445
          %s447 = sshll.u32 %s437, 4
          %s448 = int_to_ptr.vmem [resolvable:$true] %s447
          %453 = dma.vmem_to_hbm [thread:$0]  %s448, 256, %s446, %s434, 128, 128, 8
        $region40: #{tpu_custom_call.1} parent=27 // pred_fallthru
          _
      $region28: #{tpu_custom_call.1} parent=5 // pred_fallthru
        _
      %p454 = scmp.le.s32.totalorder 2, %s15
      // Predicated region
      $region41: #{tpu_custom_call.1} parent=5 // pred_check
        %p455 = pneg %p454
      $region42: #{tpu_custom_call.1} parent=5 // pred_check_branch
        %457 = sbr.rel (%p455) target = $region44
      $region43: #{tpu_custom_call.1} parent=5 // pred_region
        %s458 = ssub.s32 %s15, 2
        // Predicated region
        $region45: #{tpu_custom_call.1} parent=43 // pred_check
          %p459 = pneg %p91
        $region46: #{tpu_custom_call.1} parent=43 // pred_check_branch
          %461 = sbr.rel (%p459) target = $region48
        $region47: #{tpu_custom_call.1} parent=43 // pred_region
          %s462 = sand.u32 %s76, 1
          %s463 = scalar_lea.sflag [#allocation5], %s462
          %s464 = sand.u32 %s76, 1
          %s465 = smul.addr %s464, 16
          %s466 = scalar_lea.vmem [#allocation8], %s465
          %467 = dma.done %s463, 256
        $region48: #{tpu_custom_call.1} parent=43 // pred_fallthru
          _
      $region44: #{tpu_custom_call.1} parent=5 // pred_fallthru
        _
    $region6: #{tpu_custom_call.1} parent=1 // loop_footer
      %s19 = sadd.s32 1, %s15
    $region7: #{tpu_custom_call.1} parent=1 // loop_footer_branch
      %14 = sbr.rel target = $region3
    $region8: #{tpu_custom_call.1} parent=1 // loop_exit
      _
    %468 = vsyncpa [#allocation4], 1
    %s469 = scalar_lea.sflag [#allocation4], 1
    %470 = vsyncpa %s469, 1
    %471 = vsyncpa [#allocation7], 1
    %472 = vsyncpa [#allocation5], 1
    %s473 = scalar_lea.sflag [#allocation5], 1
    %474 = vsyncpa %s473, 1

</llo_original>
